<compile_context>
chip_gen: v7x
topology: tpu7x:2x2x1
jax: 0.10.0
libtpu: 0.0.40
codegen_flags: <defaults>
</compile_context>

<pallas_src>
import functools
import math

import jax
import jax.numpy as jnp
from jax.experimental import pallas as pl
from jax.experimental.pallas import tpu as pltpu


def _label_smoothing_kernel(logit_ref, tgt_ref, loss_ref, *,
                            coeff_tgt, coeff_sum, const_c):
    # logit_ref: (TN, V) float (any), tgt_ref: (TN, 1) int32, loss_ref: (TN, 1) f32
    x = logit_ref[...].astype(jnp.float32)                        # (TN, V)
    v = x.shape[-1]

    # log-softmax pieces; never materialize full logP or true_dist.
    m = jnp.max(x, axis=-1, keepdims=True)                        # (TN, 1)
    z = x - m                                                     # (TN, V)
    lse = jnp.log(jnp.sum(jnp.exp(z), axis=-1, keepdims=True))    # (TN, 1)

    sum_z = jnp.sum(z, axis=-1, keepdims=True)                    # (TN, 1)
    tgt = tgt_ref[...]                                            # (TN, 1) int32
    col = jax.lax.broadcasted_iota(jnp.int32, x.shape, 1)         # (TN, V)
    z_t = jnp.sum(jnp.where(col == tgt, z, 0.0),
                  axis=-1, keepdims=True)                         # z[target]

    logp_t = z_t - lse                                            # logP[target]
    sum_logp = sum_z - v * lse                                    # sum_v logP

    # KL(true_dist || softmax(logit)) summed over V:
    #   loss = C - (confidence - smooth_val)*logP[t] - smooth_val*sum(logP)
    loss_ref[...] = const_c - coeff_tgt * logp_t - coeff_sum * sum_logp


def _xlogx(x):
    # x * log(x) with the 0*log(0) -> 0 limit (handles smoothing == 0 / 1).
    return 0.0 if x <= 0.0 else x * math.log(x)


def _round_up(x, m):
    return ((x + m - 1) // m) * m


def label_smoothing_loss(logit, target_seq, *, smoothing=0.1,
                         ignore_index=None, row_tile=None):
    """Pallas equivalent of LabelSmoothing.forward(logit, target_seq)."""
    V = logit.shape[-1]
    x = logit.reshape(-1, V)                      # keep caller dtype (bf16 ok)
    t = target_seq.reshape(-1).astype(jnp.int32)
    N = x.shape[0]

    dtype_bytes = jnp.dtype(x.dtype).itemsize
    # Sublane alignment for packed dtypes: f32 -> 8, bf16 -> 16, int8/fp8 -> 32.
    sublane = max(8, 32 // dtype_bytes)

    if row_tile is None:
        # ~6 MiB per logits block -> ~12 MiB double-buffered; fits the scoped
        # VMEM budget on v5e/v6e/v7x while amortizing per-step overhead.
        budget = 6 * 1024 * 1024
        row_tile = budget // (V * dtype_bytes)
        row_tile = max(sublane, min(1024, row_tile))
    row_tile = max(sublane, (row_tile // sublane) * sublane)
    row_tile = min(row_tile, _round_up(N, sublane))

    N_pad = _round_up(N, row_tile)
    if N_pad != N:
        x = jnp.pad(x, ((0, N_pad - N), (0, 0)))
        t_pad = jnp.pad(t, ((0, N_pad - N),))
    else:
        t_pad = t

    confidence = 1.0 - smoothing
    smooth_val = smoothing / (V - 1)
    const_c = _xlogx(confidence) + (V - 1) * _xlogx(smooth_val)

    per_row = pl.pallas_call(
        functools.partial(_label_smoothing_kernel,
                          coeff_tgt=float(confidence - smooth_val),
                          coeff_sum=float(smooth_val),
                          const_c=float(const_c)),
        out_shape=jax.ShapeDtypeStruct((N_pad, 1), jnp.float32),
        grid=(N_pad // row_tile,),
        in_specs=[
            pl.BlockSpec((row_tile, V), lambda i: (i, 0)),
            pl.BlockSpec((row_tile, 1), lambda i: (i, 0)),
        ],
        out_specs=pl.BlockSpec((row_tile, 1), lambda i: (i, 0)),
        compiler_params=pltpu.CompilerParams(
            dimension_semantics=("parallel",),
            vmem_limit_bytes=32 * 1024 * 1024),
    )(x, t_pad.reshape(N_pad, 1))

    per_row = per_row[:N, 0]                                       # (N,)
    if ignore_index is None:
        mask = jnp.ones((N,), jnp.float32)
    else:
        mask = (t != ignore_index).astype(jnp.float32)
    # masked_select(loss, mask).mean()
    return jnp.sum(per_row * mask) / jnp.sum(mask)


def _reference_loss(logit, target_seq, *, smoothing=0.1, ignore_index=None):
    # Pure-JAX reference mirroring the PyTorch module.
    V = logit.shape[-1]
    x = logit.reshape(-1, V).astype(jnp.float32)
    t = target_seq.reshape(-1).astype(jnp.int32)
    logP = jax.nn.log_softmax(x, axis=-1)
    confidence = 1.0 - smoothing
    true_dist = jnp.full_like(logP, smoothing / (V - 1))
    true_dist = true_dist.at[jnp.arange(t.shape[0]), t].set(confidence)
    kl = true_dist * (jnp.log(true_dist) - logP)
    loss = jnp.sum(kl, axis=-1)
    if ignore_index is None:
        mask = jnp.ones_like(loss)
    else:
        mask = (t != ignore_index).astype(jnp.float32)
    return jnp.sum(loss * mask) / jnp.sum(mask)


if __name__ == "__main__":
    key = jax.random.PRNGKey(0)
    k1, k2, k3, k4 = jax.random.split(key, 4)

    # Test 1: f32 logits, ignore_index masking.
    B, T, V = 2, 8, 128
    logit = jax.random.normal(k1, (B, T, V), dtype=jnp.float32)
    target = jax.random.randint(k2, (B, T), 0, V, dtype=jnp.int32)
    out = label_smoothing_loss(logit, target, smoothing=0.1, ignore_index=0)
    out = jax.block_until_ready(out)
    ref = _reference_loss(logit, target, smoothing=0.1, ignore_index=0)
    assert jnp.allclose(out, ref, rtol=1e-5, atol=1e-5), (out, ref)

    # Test 2: bf16 logits (halved HBM traffic), ragged N (padding path),
    # no ignore_index (module default), different smoothing.
    B2, T2, V2 = 3, 7, 200
    logit2 = jax.random.normal(k3, (B2, T2, V2),
                               dtype=jnp.float32).astype(jnp.bfloat16)
    target2 = jax.random.randint(k4, (B2, T2), 0, V2, dtype=jnp.int32)
    out2 = jax.block_until_ready(
        label_smoothing_loss(logit2, target2, smoothing=0.2, ignore_index=None))
    ref2 = _reference_loss(logit2, target2, smoothing=0.2, ignore_index=None)
    assert jnp.allclose(out2, ref2, rtol=1e-4, atol=1e-4), (out2, ref2)

    print("KERNEL_OK")
</pallas_src>

<mosaic_0001>
module attributes {stable_mosaic.version = 11 : i64} {
  func.func @_label_smoothing_kernel(%arg0: i32, %arg1: memref<16x128xf32, #tpu.memory_space<vmem>>, %arg2: memref<16x1xi32, #tpu.memory_space<vmem>>, %arg3: memref<16x1xf32, #tpu.memory_space<vmem>>) attributes {dimension_semantics = [#tpu.dimension_semantics<parallel>], iteration_bounds = array<i64: 1>, scalar_prefetch = 0 : i64, scratch_operands = 0 : i64, tpu.core_type = #tpu.core_type<tc>, window_params = [{transform_indices = @transform_0, window_bounds = array<i64: 16, 128>}, {transform_indices = @transform_1, window_bounds = array<i64: 16, 1>}, {transform_indices = @transform_2, window_bounds = array<i64: 16, 1>}]} {
    %c0 = arith.constant 0 : index
    %c0_0 = arith.constant 0 : index
    %0 = vector.load %arg1[%c0, %c0_0] : memref<16x128xf32, #tpu.memory_space<vmem>>, vector<16x128xf32>
    %cst = arith.constant dense<0xFF800000> : vector<16xf32>
    %1 = vector.multi_reduction <maximumf>, %0, %cst [1] : vector<16x128xf32> to vector<16xf32>
    %2 = vector.shape_cast %1 : vector<16xf32> to vector<16x1xf32>
    %3 = vector.broadcast %2 : vector<16x1xf32> to vector<16x128xf32>
    %4 = arith.subf %0, %3 : vector<16x128xf32>
    %5 = math.exp %4 : vector<16x128xf32>
    %cst_1 = arith.constant dense<0.000000e+00> : vector<16xf32>
    %6 = vector.multi_reduction <add>, %5, %cst_1 [1] : vector<16x128xf32> to vector<16xf32>
    %7 = vector.shape_cast %6 : vector<16xf32> to vector<16x1xf32>
    %8 = math.log %7 : vector<16x1xf32>
    %cst_2 = arith.constant dense<0.000000e+00> : vector<16xf32>
    %9 = vector.multi_reduction <add>, %4, %cst_2 [1] : vector<16x128xf32> to vector<16xf32>
    %10 = vector.shape_cast %9 : vector<16xf32> to vector<16x1xf32>
    %c0_3 = arith.constant 0 : index
    %c0_4 = arith.constant 0 : index
    %11 = vector.load %arg2[%c0_3, %c0_4] : memref<16x1xi32, #tpu.memory_space<vmem>>, vector<16x1xi32>
    %12 = tpu.iota {dimensions = array<i32: 1>} : vector<16x128xi32>
    %13 = vector.broadcast %11 : vector<16x1xi32> to vector<16x128xi32>
    %14 = arith.cmpi eq, %12, %13 : vector<16x128xi32>
    %cst_5 = arith.constant 0.000000e+00 : f32
    %15 = vector.broadcast %cst_5 : f32 to vector<16x128xf32>
    %16 = arith.select %14, %4, %15 : vector<16x128xi1>, vector<16x128xf32>
    %cst_6 = arith.constant dense<0.000000e+00> : vector<16xf32>
    %17 = vector.multi_reduction <add>, %16, %cst_6 [1] : vector<16x128xf32> to vector<16xf32>
    %18 = vector.shape_cast %17 : vector<16xf32> to vector<16x1xf32>
    %19 = arith.subf %18, %8 : vector<16x1xf32>
    %cst_7 = arith.constant 1.280000e+02 : f32
    %20 = vector.broadcast %cst_7 : f32 to vector<16x1xf32>
    %21 = arith.mulf %20, %8 : vector<16x1xf32>
    %22 = arith.subf %10, %21 : vector<16x1xf32>
    %cst_8 = arith.constant 0.899212599 : f32
    %23 = vector.broadcast %cst_8 : f32 to vector<16x1xf32>
    %24 = arith.mulf %23, %19 : vector<16x1xf32>
    %cst_9 = arith.constant -0.809501707 : f32
    %25 = vector.broadcast %cst_9 : f32 to vector<16x1xf32>
    %26 = arith.subf %25, %24 : vector<16x1xf32>
    %cst_10 = arith.constant 7.87401571E-4 : f32
    %27 = vector.broadcast %cst_10 : f32 to vector<16x1xf32>
    %28 = arith.mulf %27, %22 : vector<16x1xf32>
    %29 = arith.subf %26, %28 : vector<16x1xf32>
    %c0_11 = arith.constant 0 : index
    %c0_12 = arith.constant 0 : index
    %30 = vector.load %arg3[%c0_11, %c0_12] : memref<16x1xf32, #tpu.memory_space<vmem>>, vector<16x1xf32>
    tpu.vector_store %arg3[%c0_11, %c0_12], %29 {strides = array<i32>} : memref<16x1xf32, #tpu.memory_space<vmem>>, vector<16x1xf32>,
    return
  }
  func.func @transform_0(%arg0: i32) -> (i32, i32) {
    %c0_i32 = arith.constant 0 : i32
    %c0_i32_0 = arith.constant 0 : i32
    return %arg0, %c0_i32 : i32, i32
  }
  func.func @transform_1(%arg0: i32) -> (i32, i32) {
    %c0_i32 = arith.constant 0 : i32
    %c0_i32_0 = arith.constant 0 : i32
    return %arg0, %c0_i32 : i32, i32
  }
  func.func @transform_2(%arg0: i32) -> (i32, i32) {
    %c0_i32 = arith.constant 0 : i32
    %c0_i32_0 = arith.constant 0 : i32
    return %arg0, %c0_i32 : i32, i32
  }
}

</mosaic_0001>

<llo_original>
// kernel: tpu_custom_call.1
$region0: #{tpu_custom_call.1}
  #allocation0 [shape = 'u32[]', space=smem, size = 0x4, offset = 0x4, fixed_abs, tag = 'smem constant byte address 0x4 - core index']
  #allocation1 [shape = 'u32[144,128]{1,0:T(1,128)}', space=vmem, size = 0x12000, scoped, tag = 'internal scratch']
  %s0 = inlined_call_operand.vmem [shape: f32[16,128], index: 0, kind: input, shape index: {}]
  %s1 = inlined_call_operand.vmem [shape: s32[16,1], index: 1, kind: input, shape index: {}]
  %s2 = inlined_call_operand.vmem [shape: f32[16,1], index: 2, kind: output, shape index: {}]
  %s3 = sld [smem:[#allocation0]]
  $region18: #{tpu_custom_call.1} parent=0
    _
  %s5 = ssub.s32 1, %s3
  %s6 = scalar_select 0, %s5, %s3
  // Predicated region
  $region2: #{tpu_custom_call.1} parent=0 // pred_check
    _
  $region3: #{tpu_custom_call.1} parent=0 // pred_check_branch
    %8 = sbr.rel (0) target = $region5
  $region4: #{tpu_custom_call.1} parent=0 // pred_region
    _
  $region5: #{tpu_custom_call.1} parent=0 // pred_fallthru
    _
  // Predicated region
  $region6: #{tpu_custom_call.1} parent=0 // pred_check
    _
  $region7: #{tpu_custom_call.1} parent=0 // pred_check_branch
    %10 = sbr.rel (0) target = $region9
  $region8: #{tpu_custom_call.1} parent=0 // pred_region
    _
  $region9: #{tpu_custom_call.1} parent=0 // pred_fallthru
    _
  %v11 = vld [vmem:[%s0] sm:$0xff]
  %v12 = vld [vmem:[%s0 + $0x8] sm:$0xff]
  %13 = vmax.xlane.f32.xlu0 %v11
  %v14 = vpop.xlane.xlu0 %13
  %15 = vmax.xlane.f32.xlu0 %v12
  %v16 = vpop.xlane.xlu0 %15
  %v17 = vsub.f32 %v11, %v14
  %v18 = vsub.f32 %v12, %v16
  %v19 = vmul.f32 %v17, 1.442695
  %v20 = vpow.pop %v19
  %v21 = vmul.f32 %v18, 1.442695
  %v22 = vpow.pop %v21
  %23 = vadd.xlane.f32.xlu0 %v20
  %v24 = vpop.xlane.xlu0 %23
  %25 = vadd.xlane.f32.xlu0 %v22
  %v26 = vpop.xlane.xlu0 %25
  %v27 = vlog2.pop %v24
  %v28 = vmul.f32 %v27, 0.6931472
  %v29 = vlog2.pop %v26
  %v30 = vmul.f32 %v29, 0.6931472
  %31 = vadd.xlane.f32.xlu0 %v17
  %v32 = vpop.xlane.xlu0 %31
  %33 = vadd.xlane.f32.xlu0 %v18
  %v34 = vpop.xlane.xlu0 %33
  %v35 = vld [vmem:[%s1] sm:$0xff]
  %v36 = vld [vmem:[%s1 + $0x8] sm:$0xff]
  %v37 = vlaneseq
  %v38 = vand.u32 %v37, 127
  %39 = vset.pattern.permute.xlu0 0
  %40 = vperm.xlu0 %39, %v35
  %v41 = vpop.permute.xlu0 %40
  %42 = vset.pattern.permute.xlu0 0
  %43 = vperm.xlu0 %42, %v36
  %v44 = vpop.permute.xlu0 %43
  %vm45 = vcmp.eq.s32.totalorder %v38, %v41
  %vm46 = vcmp.eq.s32.totalorder %v38, %v44
  %v47 = vsel %vm45, %v17, 0.0
  %v48 = vsel %vm46, %v18, 0.0
  %49 = vadd.xlane.f32.xlu0 %v47
  %v50 = vpop.xlane.xlu0 %49
  %51 = vadd.xlane.f32.xlu0 %v48
  %v52 = vpop.xlane.xlu0 %51
  %v53 = vsub.f32 %v50, %v28
  %v54 = vsub.f32 %v52, %v30
  %v55 = vmul.f32 %v28, 128.0
  %v56 = vmul.f32 %v30, 128.0
  %v57 = vsub.f32 %v32, %v55
  %v58 = vsub.f32 %v34, %v56
  %v59 = vmul.f32 %v53, 0.8992126
  %v60 = vmul.f32 %v54, 0.8992126
  %v61 = vsub.f32 -0.8095017, %v59
  %v62 = vsub.f32 -0.8095017, %v60
  %v63 = vmul.f32 %v57, 0.0007874016
  %v64 = vmul.f32 %v58, 0.0007874016
  %v65 = vsub.f32 %v61, %v63
  %v66 = vsub.f32 %v62, %v64
  %vm67 = vcmask 7168
  %68 = vst.msk [vmem:[%s2] sm:$0xff] %vm67, %v65
  %69 = vst.msk [vmem:[%s2 + $0x8] sm:$0xff] %vm67, %v66
  // Predicated region
  $region10: #{tpu_custom_call.1} parent=0 // pred_check
    _
  $region11: #{tpu_custom_call.1} parent=0 // pred_check_branch
    %71 = sbr.rel (0) target = $region13
  $region12: #{tpu_custom_call.1} parent=0 // pred_region
    _
  $region13: #{tpu_custom_call.1} parent=0 // pred_fallthru
    _
  // Predicated region
  $region14: #{tpu_custom_call.1} parent=0 // pred_check
    _
  $region15: #{tpu_custom_call.1} parent=0 // pred_check_branch
    %73 = sbr.rel (0) target = $region17
  $region16: #{tpu_custom_call.1} parent=0 // pred_region
    _
  $region17: #{tpu_custom_call.1} parent=0 // pred_fallthru
    _

</llo_original>
